<compile_context>
chip_gen: v7x
topology: tpu7x:2x2x1
jax: 0.10.0
libtpu: 0.0.40
codegen_flags: <defaults>
</compile_context>

<pallas_src>
import functools

import jax
import jax.numpy as jnp
import numpy as np
from jax.experimental import pallas as pl
from jax.experimental.pallas import tpu as pltpu


# ----------------- kernel 1: hoisted input projection (row-tiled, fused gates) -----------
def _input_proj_kernel(x_ref, w_ref, b_ref, gx_ref):
    gx_ref[...] = (jnp.dot(x_ref[...], w_ref[...], preferred_element_type=jnp.float32)
                   + b_ref[...])


def input_projection(x_flat, w_ih_all, b_all, row_block):
    NB, Dtxt = x_flat.shape
    G = w_ih_all.shape[1]                              # 4*H
    assert NB % row_block == 0
    grid_spec = pltpu.PrefetchScalarGridSpec(
        num_scalar_prefetch=0,
        grid=(NB // row_block,),
        in_specs=[
            pl.BlockSpec((row_block, Dtxt), lambda i: (i, 0)),
            pl.BlockSpec((Dtxt, G), lambda i: (0, 0)),   # resident fused gate weights
            pl.BlockSpec((1, G), lambda i: (0, 0)),
        ],
        out_specs=pl.BlockSpec((row_block, G), lambda i: (i, 0)),
    )
    return pl.pallas_call(
        _input_proj_kernel,
        out_shape=jax.ShapeDtypeStruct((NB, G), jnp.float32),
        grid_spec=grid_spec,
        compiler_params=pltpu.CompilerParams(dimension_semantics=("parallel",)),
    )(x_flat, w_ih_all, b_all)


# ----------------- kernel 2: LSTM recurrence, time-blocked grid, fused W_hh --------------
def _lstm_kernel(gx_ref, src_ref, winit_ref, binit_ref, whh_ref, out_ref, h_sc, c_sc):
    blk = pl.program_id(0)
    B, H = h_sc.shape

    @pl.when(blk == 0)
    def _():
        hc = jnp.tanh(jnp.dot(src_ref[...], winit_ref[...],
                              preferred_element_type=jnp.float32) + binit_ref[...])
        h_sc[...] = hc[:, :H]
        c_sc[...] = hc[:, H:]

    h = h_sc[...]
    c = c_sc[...]
    whh = whh_ref[...]                                  # (H, 4H) fused recurrent weight
    tb = gx_ref.shape[0] // B
    for s in range(tb):                                 # unrolled time steps within a block
        g = (gx_ref[pl.ds(s * B, B), :]
             + jnp.dot(h, whh, preferred_element_type=jnp.float32))   # (B, 4H)
        i_g = jax.nn.sigmoid(g[:, 0 * H:1 * H])
        f_g = jax.nn.sigmoid(g[:, 1 * H:2 * H])
        g_g = jnp.tanh(g[:, 2 * H:3 * H])
        o_g = jax.nn.sigmoid(g[:, 3 * H:4 * H])
        c = f_g * c + i_g * g_g
        h = o_g * jnp.tanh(c)
        out_ref[pl.ds(s * B, B), :] = h
    h_sc[...] = h
    c_sc[...] = c


def lstm_decode(gx_flat, src, w_init_all, b_init_all, w_hh_all, B, H, time_block):
    NB = gx_flat.shape[0]
    Tpad = NB // B
    assert Tpad % time_block == 0
    rows = time_block * B
    Dimg = src.shape[1]
    grid_spec = pltpu.PrefetchScalarGridSpec(
        num_scalar_prefetch=0,
        grid=(Tpad // time_block,),
        in_specs=[
            pl.BlockSpec((rows, 4 * H), lambda t: (t, 0)),
            pl.BlockSpec((B, Dimg), lambda t: (0, 0)),
            pl.BlockSpec((Dimg, 2 * H), lambda t: (0, 0)),
            pl.BlockSpec((1, 2 * H), lambda t: (0, 0)),
            pl.BlockSpec((H, 4 * H), lambda t: (0, 0)),
        ],
        out_specs=pl.BlockSpec((rows, H), lambda t: (t, 0)),
        scratch_shapes=[pltpu.VMEM((B, H), jnp.float32),
                        pltpu.VMEM((B, H), jnp.float32)],
    )
    return pl.pallas_call(
        _lstm_kernel,
        out_shape=jax.ShapeDtypeStruct((NB, H), jnp.float32),
        grid_spec=grid_spec,
        compiler_params=pltpu.CompilerParams(dimension_semantics=("arbitrary",)),
    )(gx_flat, src, w_init_all, b_init_all, w_hh_all)


# ----------------- kernel 3: fused MoS heads + picked-logprob NLL losses -----------------
def _mos_head_kernel(h_ref, w_ref, b_ref, tgt_ref, tag_ref,
                     loss_ref, nnloss_ref,
                     num_sc, den_sc, mnum_sc, mden_sc):
    i = pl.program_id(0)

    @pl.when(i == 0)
    def _():
        num_sc[...] = jnp.zeros_like(num_sc)
        den_sc[...] = jnp.zeros_like(den_sc)
        mnum_sc[...] = jnp.zeros_like(mnum_sc)
        mden_sc[...] = jnp.zeros_like(mden_sc)

    h = h_ref[...]                                      # (rb, H)
    # one fused MXU matmul for all four heads; segments are 128-lane-aligned
    z = jnp.dot(h, w_ref[...], preferred_element_type=jnp.float32) + b_ref[...]
    vp = z.shape[1] // 4
    n = h.shape[0]
    lane = jax.lax.broadcasted_iota(jnp.int32, (n, vp), 1)
    tgt = tgt_ref[...]                                  # (rb, 1) int32
    tag = tag_ref[...]                                  # (rb, 1) int32

    # Per-head softmax probability AT THE TARGET index only: full-width work is limited to
    # one max, one exp, one sum per head (no full-width probs / log).  Exact division.
    def head_prob_at_tgt(zk):
        m = jnp.max(zk, axis=-1, keepdims=True)                       # (rb, 1)
        s = jnp.sum(jnp.exp(zk - m), axis=-1, keepdims=True)          # (rb, 1)
        zt = jnp.sum(jnp.where(lane == tgt, zk, 0.0), axis=-1, keepdims=True)
        return jnp.exp(zt - m) / s

    p0 = head_prob_at_tgt(z[:, 0 * vp:1 * vp])
    p1 = head_prob_at_tgt(z[:, 1 * vp:2 * vp])
    p2 = head_prob_at_tgt(z[:, 2 * vp:3 * vp])

    # mixture gate (padded lanes carry bias -1e9 -> contribute 0)
    mz = z[:, 3 * vp:4 * vp]
    mg = jnp.max(mz, axis=-1, keepdims=True)
    me = jnp.exp(mz - mg)
    ms = jnp.sum(me, axis=-1, keepdims=True)
    inv_ms = 1.0 / ms
    mix0 = me[:, 0:1] * inv_ms
    mix1 = me[:, 1:2] * inv_ms
    mix2 = me[:, 2:3] * inv_ms
    mzt = jnp.sum(jnp.where(lane == tag, mz, 0.0), axis=-1, keepdims=True)
    picked_m = (mzt - mg) - jnp.log(ms)                 # stable log-softmax of gate at tag

    p_t = mix0 * p0 + mix1 * p1 + mix2 * p2             # mixture prob at target word
    picked = jnp.log(p_t + 1e-9)                        # same 1e-9 floor as reference

    valid = (tgt != 0).astype(jnp.float32)              # NLLLoss ignore_index=0
    valid_m = (tag != 0).astype(jnp.float32)
    num_sc[...] += jnp.sum(picked * valid, keepdims=True)
    den_sc[...] += jnp.sum(valid, keepdims=True)
    mnum_sc[...] += jnp.sum(picked_m * valid_m, keepdims=True)
    mden_sc[...] += jnp.sum(valid_m, keepdims=True)

    @pl.when(i == pl.num_programs(0) - 1)
    def _():
        loss_ref[...] = -num_sc[...] / jnp.maximum(den_sc[...], 1.0)
        nnloss_ref[...] = -mnum_sc[...] / jnp.maximum(mden_sc[...], 1.0)


def mos_head_loss(h_flat, w_all, b_all, tgt_flat, tag_flat, row_block):
    N, H = h_flat.shape
    C = w_all.shape[1]
    assert N % row_block == 0
    grid_spec = pltpu.PrefetchScalarGridSpec(
        num_scalar_prefetch=0,
        grid=(N // row_block,),
        in_specs=[
            pl.BlockSpec((row_block, H), lambda i: (i, 0)),
            pl.BlockSpec((H, C), lambda i: (0, 0)),     # resident fused head weight
            pl.BlockSpec((1, C), lambda i: (0, 0)),
            pl.BlockSpec((row_block, 1), lambda i: (i, 0)),
            pl.BlockSpec((row_block, 1), lambda i: (i, 0)),
        ],
        out_specs=(pl.BlockSpec((1, 1), lambda i: (0, 0)),
                   pl.BlockSpec((1, 1), lambda i: (0, 0))),
        scratch_shapes=[pltpu.VMEM((1, 1), jnp.float32) for _ in range(4)],
    )
    return pl.pallas_call(
        _mos_head_kernel,
        out_shape=(jax.ShapeDtypeStruct((1, 1), jnp.float32),
                   jax.ShapeDtypeStruct((1, 1), jnp.float32)),
        grid_spec=grid_spec,
        compiler_params=pltpu.CompilerParams(dimension_semantics=("arbitrary",)),
    )(h_flat, w_all, b_all, tgt_flat, tag_flat)


# ------------------------- parameter init + forward --------------------------------------
def init_params(key, V, Dtxt, Dimg, Htxt):
    ks = jax.random.split(key, 14)

    def lin(k, fan_in, shape):
        bound = 1.0 / np.sqrt(fan_in)
        return jax.random.uniform(k, shape, jnp.float32, -bound, bound)

    embed = jax.random.normal(ks[0], (V, Dtxt), jnp.float32) * 0.1
    embed = embed.at[0].set(0.0)                         # padding_idx=0
    return dict(
        embed=embed,
        w_init=lin(ks[1], Dimg, (2, Dimg, Htxt)),        # [hidden_fc, cell_fc]
        b_init=lin(ks[2], Dimg, (2, 1, Htxt)),
        w_ih=lin(ks[3], Htxt, (4, Dtxt, Htxt)),          # gate order i|f|g|o
        w_hh=lin(ks[4], Htxt, (4, Htxt, Htxt)),
        b_lstm=lin(ks[5], Htxt, (4, 1, Htxt)),           # bias_ih + bias_hh combined
        w_word=lin(ks[6], Htxt, (Htxt, V)), b_word=lin(ks[7], Htxt, (1, V)),
        w_nn=lin(ks[8], Htxt, (Htxt, V)), b_nn=lin(ks[9], Htxt, (1, V)),
        w_vb=lin(ks[10], Htxt, (Htxt, V)), b_vb=lin(ks[11], Htxt, (1, V)),
        w_mos=lin(ks[12], Htxt, (Htxt, 3)), b_mos=lin(ks[13], Htxt, (1, 3)),
    )


def mos_forward(params, src, tgt, nn_mask, vb_mask, time_block=16, row_block_target=256):
    B, T = tgt.shape
    H = params['w_hh'].shape[-1]
    Dtxt = params['embed'].shape[1]
    V = params['w_word'].shape[1]
    Tm1 = T - 1
    Tpad = pl.cdiv(Tm1, time_block) * time_block
    NB = Tpad * B

    # ---- fuse per-gate weights into single wide MXU operands (tiny one-time glue) --------
    w_ih_all = jnp.transpose(params['w_ih'], (1, 0, 2)).reshape(Dtxt, 4 * H)
    b_lstm_all = jnp.transpose(params['b_lstm'], (1, 0, 2)).reshape(1, 4 * H)
    w_hh_all = jnp.transpose(params['w_hh'], (1, 0, 2)).reshape(H, 4 * H)
    w_init_all = jnp.transpose(params['w_init'], (1, 0, 2)).reshape(-1, 2 * H)
    b_init_all = jnp.transpose(params['b_init'], (1, 0, 2)).reshape(1, 2 * H)

    # ---- glue: transpose only tiny int id/tag matrices, keep activations time-major ------
    tgt_in = jnp.pad(jnp.transpose(tgt[:, :-1]), ((0, Tpad - Tm1), (0, 0)))   # (Tpad, B)
    x_flat = params['embed'][tgt_in].reshape(NB, Dtxt)    # embedding gather glue

    # ---- kernel 1: hoisted input projection, one wide matmul per row tile ----------------
    prep_rows = time_block * B                            # always divides NB
    gx_flat = input_projection(x_flat, w_ih_all, b_lstm_all, prep_rows)   # (NB, 4H)

    # ---- kernel 2: sequential LSTM over time blocks (h0/c0 init fused at block 0) --------
    dec_flat = lstm_decode(gx_flat, src, w_init_all, b_init_all, w_hh_all,
                           B, H, time_block)              # (NB, H), time-major

    # ---- targets / tags, time-major, zero-padded (0 == ignore_index) ---------------------
    tags = jnp.where(vb_mask, 2, jnp.where(nn_mask, 1, 0)).astype(jnp.int32)
    tgt_tm = jnp.pad(jnp.transpose(tgt[:, 1:]).astype(jnp.int32), ((0, Tpad - Tm1), (0, 0)))
    tag_tm = jnp.pad(jnp.transpose(tags[:, 1:]), ((0, Tpad - Tm1), (0, 0)))
    tgt_flat = tgt_tm.reshape(NB, 1)
    tag_flat = tag_tm.reshape(NB, 1)

    # ---- fused, 128-lane-padded head weights [word | nn | vb | mos-gate] -----------------
    Vp = ((max(V, 3) + 127) // 128) * 128
    def padw(w): return jnp.pad(w, ((0, 0), (0, Vp - w.shape[1])))
    def padb(b): return jnp.pad(b, ((0, 0), (0, Vp - b.shape[1])), constant_values=-1e9)
    w_all = jnp.concatenate([padw(params['w_word']), padw(params['w_nn']),
                             padw(params['w_vb']), padw(params['w_mos'])], axis=1)
    b_all = jnp.concatenate([padb(params['b_word']), padb(params['b_nn']),
                             padb(params['b_vb']), padb(params['b_mos'])], axis=1)

    # ---- kernel 3: MoS heads + losses (large row tiles; pad rows to a tile multiple) -----
    row_block = min(row_block_target, NB)
    Nr = pl.cdiv(NB, row_block) * row_block
    if Nr != NB:
        dec_flat = jnp.pad(dec_flat, ((0, Nr - NB), (0, 0)))
        tgt_flat = jnp.pad(tgt_flat, ((0, Nr - NB), (0, 0)))
        tag_flat = jnp.pad(tag_flat, ((0, Nr - NB), (0, 0)))
    loss, nn_loss = mos_head_loss(dec_flat, w_all, b_all, tgt_flat, tag_flat, row_block)
    num_words = jnp.sum(tgt[:, 1:] != 0)
    num_nn = jnp.sum(nn_mask)
    return loss[0, 0], num_words, nn_loss[0, 0], num_nn


# ------------------------- pure-JAX reference (for verification) -------------------------
def reference_forward(params, src, tgt, nn_mask, vb_mask):
    h0 = jnp.tanh(src @ params['w_init'][0] + params['b_init'][0])
    c0 = jnp.tanh(src @ params['w_init'][1] + params['b_init'][1])
    emb = params['embed'][tgt]                           # (B, T, Dtxt)

    def step(carry, x_t):
        h, c = carry
        def gate(k):
            return x_t @ params['w_ih'][k] + h @ params['w_hh'][k] + params['b_lstm'][k]
        i = jax.nn.sigmoid(gate(0))
        f = jax.nn.sigmoid(gate(1))
        g = jnp.tanh(gate(2))
        o = jax.nn.sigmoid(gate(3))
        c = f * c + i * g
        h = o * jnp.tanh(c)
        return (h, c), h

    x = jnp.transpose(emb[:, :-1, :], (1, 0, 2))
    _, hs = jax.lax.scan(step, (h0, c0), x)
    dec = jnp.transpose(hs, (1, 0, 2))                   # (B, T-1, H)

    sm = functools.partial(jax.nn.softmax, axis=-1)
    probs = sm(dec @ params['w_word'] + params['b_word'][0])
    nn_probs = sm(dec @ params['w_nn'] + params['b_nn'][0])
    vb_probs = sm(dec @ params['w_vb'] + params['b_vb'][0])
    mix = sm(dec @ params['w_mos'] + params['b_mos'][0])
    total = probs * mix[..., 0:1] + nn_probs * mix[..., 1:2] + vb_probs * mix[..., 2:3]
    V = probs.shape[-1]
    logp = jnp.log(total + 1e-9).reshape(-1, V)
    mix_logp = jnp.log(mix).reshape(-1, 3)

    tgt_f = tgt[:, 1:].reshape(-1)
    tags = jnp.where(vb_mask, 2, jnp.where(nn_mask, 1, 0))[:, 1:].reshape(-1)
    pick = jnp.take_along_axis(logp, tgt_f[:, None], axis=1)[:, 0]
    valid = (tgt_f != 0).astype(jnp.float32)
    loss = -jnp.sum(pick * valid) / jnp.sum(valid)
    pick_m = jnp.take_along_axis(mix_logp, tags[:, None], axis=1)[:, 0]
    valid_m = (tags != 0).astype(jnp.float32)
    nn_loss = -jnp.sum(pick_m * valid_m) / jnp.sum(valid_m)
    return loss, nn_loss


if __name__ == "__main__":
    B, T = 2, 8          # batch, target sequence length
    V = 64               # vocab_size = len(word2id) + 1
    Dtxt, Htxt = 32, 32  # txt_input_size, txt_hidden_size
    Dimg = 16            # img_input_size == img_hidden_size

    key = jax.random.PRNGKey(0)
    kp, kd1, kd2 = jax.random.split(key, 3)
    params = init_params(kp, V, Dtxt, Dimg, Htxt)

    src = jax.random.normal(kd1, (B, Dimg), jnp.float32)                 # batch['video']
    tgt = jax.random.randint(kd2, (B, T), 1, V).astype(jnp.int32)        # batch['text']
    tgt = tgt.at[1, 6:].set(0)                                           # padded tail
    nn_mask = jnp.zeros((B, T), dtype=bool).at[0, 2].set(True).at[1, 3].set(True)
    vb_mask = jnp.zeros((B, T), dtype=bool).at[0, 4].set(True).at[1, 1].set(True)

    out = jax.block_until_ready(mos_forward(params, src, tgt, nn_mask, vb_mask))
    loss, num_words, nn_loss, num_nn = out

    ref_loss, ref_nn_loss = reference_forward(params, src, tgt, nn_mask, vb_mask)
    assert np.allclose(float(loss), float(ref_loss), rtol=2e-3, atol=2e-3), (loss, ref_loss)
    assert np.allclose(float(nn_loss), float(ref_nn_loss), rtol=2e-3, atol=2e-3), (nn_loss, ref_nn_loss)
    assert int(num_words) == int(np.sum(np.asarray(tgt)[:, 1:] != 0))
    assert int(num_nn) == int(np.sum(np.asarray(nn_mask)))

    print("KERNEL_OK")
</pallas_src>

<mosaic_0001>
module attributes {stable_mosaic.version = 11 : i64} {
  func.func @_input_proj_kernel(%arg0: i32, %arg1: memref<32x32xf32, #tpu.memory_space<vmem>>, %arg2: memref<32x128xf32, #tpu.memory_space<vmem>>, %arg3: memref<1x128xf32, #tpu.memory_space<vmem>>, %arg4: memref<32x128xf32, #tpu.memory_space<vmem>>) attributes {dimension_semantics = [#tpu.dimension_semantics<parallel>], iteration_bounds = array<i64: 1>, scalar_prefetch = 0 : i64, scratch_operands = 0 : i64, tpu.core_type = #tpu.core_type<tc>, window_params = [{transform_indices = @transform_0, window_bounds = array<i64: 32, 32>}, {pipeline_mode = #tpu.pipeline_mode<synchronous>, transform_indices = @transform_1, window_bounds = array<i64: 32, 128>}, {pipeline_mode = #tpu.pipeline_mode<synchronous>, transform_indices = @transform_2, window_bounds = array<i64: 1, 128>}, {transform_indices = @transform_3, window_bounds = array<i64: 32, 128>}]} {
    %c0 = arith.constant 0 : index
    %c0_0 = arith.constant 0 : index
    %0 = vector.load %arg1[%c0, %c0_0] : memref<32x32xf32, #tpu.memory_space<vmem>>, vector<32x32xf32>
    %c0_1 = arith.constant 0 : index
    %c0_2 = arith.constant 0 : index
    %1 = vector.load %arg2[%c0_1, %c0_2] : memref<32x128xf32, #tpu.memory_space<vmem>>, vector<32x128xf32>
    %cst = arith.constant dense<0.000000e+00> : vector<32x128xf32>
    %2 = tpu.matmul %0, %1, %cst {dimension_numbers = #tpu.dot_dimension_numbers<[1], [0], [0], [1], [0, 0, 1, 1], [], []>} : vector<32x32xf32>, vector<32x128xf32>, vector<32x128xf32> -> vector<32x128xf32>
    %c0_3 = arith.constant 0 : index
    %c0_4 = arith.constant 0 : index
    %3 = vector.load %arg3[%c0_3, %c0_4] : memref<1x128xf32, #tpu.memory_space<vmem>>, vector<1x128xf32>
    %4 = vector.broadcast %3 : vector<1x128xf32> to vector<32x128xf32>
    %5 = arith.addf %2, %4 : vector<32x128xf32>
    %c0_5 = arith.constant 0 : index
    %c0_6 = arith.constant 0 : index
    %6 = vector.load %arg4[%c0_5, %c0_6] : memref<32x128xf32, #tpu.memory_space<vmem>>, vector<32x128xf32>
    tpu.vector_store %arg4[%c0_5, %c0_6], %5 {strides = array<i32>} : memref<32x128xf32, #tpu.memory_space<vmem>>, vector<32x128xf32>,
    return
  }
  func.func @transform_0(%arg0: i32) -> (i32, i32) {
    %c0_i32 = arith.constant 0 : i32
    %c0_i32_0 = arith.constant 0 : i32
    return %arg0, %c0_i32 : i32, i32
  }
  func.func @transform_1(%arg0: i32) -> (i32, i32) {
    %c0_i32 = arith.constant 0 : i32
    %c0_i32_0 = arith.constant 0 : i32
    %c0_i32_1 = arith.constant 0 : i32
    return %c0_i32, %c0_i32_0 : i32, i32
  }
  func.func @transform_2(%arg0: i32) -> (i32, i32) {
    %c0_i32 = arith.constant 0 : i32
    %c0_i32_0 = arith.constant 0 : i32
    %c0_i32_1 = arith.constant 0 : i32
    return %c0_i32, %c0_i32_0 : i32, i32
  }
  func.func @transform_3(%arg0: i32) -> (i32, i32) {
    %c0_i32 = arith.constant 0 : i32
    %c0_i32_0 = arith.constant 0 : i32
    return %arg0, %c0_i32 : i32, i32
  }
}

</mosaic_0001>

<llo_original>
// kernel: tpu_custom_call.1
$region0: #{tpu_custom_call.1}
  #allocation0 [shape = 'u32[]', space=smem, size = 0x4, offset = 0x4, fixed_abs, tag = 'smem constant byte address 0x4 - core index']
  #allocation1 [shape = 'u32[144,128]{1,0:T(1,128)}', space=vmem, size = 0x12000, scoped, tag = 'internal scratch']
  %s0 = inlined_call_operand.hbm [shape: f32[32,32], index: 0, kind: input, shape index: {}]
  %s1 = inlined_call_operand.hbm [shape: f32[32,128], index: 1, kind: input, shape index: {}]
  %s2 = inlined_call_operand.vmem [shape: f32[1,128], index: 2, kind: input, shape index: {}]
  %s3 = inlined_call_operand.hbm [shape: f32[32,128], index: 3, kind: output, shape index: {}]
  %s4 = sld [smem:[#allocation0]]
  $region30: #{tpu_custom_call.1} parent=0
    _
  %s6 = ssub.s32 1, %s4
  %s7 = scalar_select 0, %s6, %s4
  $region1: #{tpu_custom_call.1} parent=0
    #allocation2 [shape = 'u8[16384]{0}', space=vmem, size = 0x4000, scoped, tag = 'input window, operand 0, single buffered']
    #allocation3 [shape = 's32[1]{0}', space=sflag, size = 0x4, scoped, tag = 'scoped memory for tpu_custom_call.1']
    #allocation4 [shape = 's32[1]{0}', space=sflag, size = 0x4, scoped, tag = 'scoped memory for tpu_custom_call.1']
    #allocation5 [shape = 'u8[16384]{0}', space=vmem, size = 0x4000, scoped, tag = 'input window, operand 1, single buffered']
    #allocation6 [shape = 's32[1]{0}', space=sflag, size = 0x4, scoped, tag = 'scoped memory for tpu_custom_call.1']
    #allocation7 [shape = 'u8[16384]{0}', space=vmem, size = 0x4000, scoped, tag = 'output window, operand 0, single buffered']
    %8 = vsyncpa [#allocation3], 0
    %9 = vsyncpa [#allocation6], 0
    %10 = vsyncpa [#allocation4], 0
    // Predicated region
    $region2: #{tpu_custom_call.1} parent=1 // pred_check
      _
    $region3: #{tpu_custom_call.1} parent=1 // pred_check_branch
      %12 = sbr.rel (0) target = $region5
    $region4: #{tpu_custom_call.1} parent=1 // pred_region
      %s14 = ssub.s32 512, 512
      %15 = vsyncadd [#allocation3], %s14
      %s16 = sshll.u32 [#allocation2], 4
      %s17 = int_to_ptr.vmem [resolvable:$true] %s16
      %22 = dma.hbm_to_vmem [thread:$0]  %s0, 512, %s17, [#allocation3], 128, 128, 8
    $region5: #{tpu_custom_call.1} parent=1 // pred_fallthru
      _
    // Predicated region
    $region6: #{tpu_custom_call.1} parent=1 // pred_check
      _
    $region7: #{tpu_custom_call.1} parent=1 // pred_check_branch
      %24 = sbr.rel (0) target = $region9
    $region8: #{tpu_custom_call.1} parent=1 // pred_region
      %s26 = ssub.s32 512, 512
      %27 = vsyncadd [#allocation6], %s26
      %s28 = sshll.u32 [#allocation5], 4
      %s29 = int_to_ptr.vmem [resolvable:$true] %s28
      %34 = dma.hbm_to_vmem [thread:$0]  %s1, 512, %s29, [#allocation6], 128, 128, 8
    $region9: #{tpu_custom_call.1} parent=1 // pred_fallthru
      _
    // Predicated region
    $region10: #{tpu_custom_call.1} parent=1 // pred_check
      _
    $region11: #{tpu_custom_call.1} parent=1 // pred_check_branch
      %36 = sbr.rel (0) target = $region13
    $region12: #{tpu_custom_call.1} parent=1 // pred_region
      _
    $region13: #{tpu_custom_call.1} parent=1 // pred_fallthru
      _
    // Predicated region
    $region14: #{tpu_custom_call.1} parent=1 // pred_check
      _
    $region15: #{tpu_custom_call.1} parent=1 // pred_check_branch
      %38 = sbr.rel (0) target = $region17
    $region16: #{tpu_custom_call.1} parent=1 // pred_region
      %39 = dma.done [#allocation3], 512
    $region17: #{tpu_custom_call.1} parent=1 // pred_fallthru
      _
    // Predicated region
    $region18: #{tpu_custom_call.1} parent=1 // pred_check
      _
    $region19: #{tpu_custom_call.1} parent=1 // pred_check_branch
      %41 = sbr.rel (0) target = $region21
    $region20: #{tpu_custom_call.1} parent=1 // pred_region
      %42 = dma.done [#allocation6], 512
    $region21: #{tpu_custom_call.1} parent=1 // pred_fallthru
      _
    %v43 = vld [vmem:[#allocation2] sm:$0xff]
    %v44 = vld [vmem:[#allocation2 + $0x8] sm:$0xff]
    %v45 = vld [vmem:[#allocation2 + $0x10] sm:$0xff]
    %v46 = vld [vmem:[#allocation2 + $0x18] sm:$0xff]
    %v47 = vld [vmem:[#allocation5] sm:$0xff]
    %v48 = vld [vmem:[#allocation5 + $0x8] sm:$0xff]
    %v49 = vld [vmem:[#allocation5 + $0x10] sm:$0xff]
    %v50 = vld [vmem:[#allocation5 + $0x18] sm:$0xff]
    %v51 = vld [vmem:[%s2] sm:$0x1]
    %v53 = vlaneseq
    %v54 = vshrl.u32 %v53, 7
    %v55 = vsub.s32 0, %v54
    %v56 = vrot.slane %v51, %v55
    %vm58 = vcmask 261120
    %v60 = vsel %vm58, %v43, 0
    %v63 = vsel %vm58, %v44, 0
    %v66 = vsel %vm58, %v45, 0
    %v69 = vsel %vm58, %v46, 0
    %71 = vmatprep.subr.mxu0 0.0
    %72 = vmatpush1.msra.mxu0 %v47
    %73 = vmatprep.subr.mxu0 0.0
    %74 = vmatpush1.msra.mxu0 %v48
    %75 = vmatprep.subr.mxu0 0.0
    %76 = vmatpush1.msra.mxu0 %v49
    %77 = vmatprep.subr.mxu0 0.0
    %78 = vmatpush1.msra.mxu0 %v50
    %79 = vmatprep.subr.mxu0 0.0
    %80 = vmatpush1.msra.mxu0 0.0
    %81 = vmatprep.subr.mxu0 0.0
    %82 = vmatpush1.msra.mxu0 0.0
    %83 = vmatprep.subr.mxu0 0.0
    %84 = vmatpush1.msra.mxu0 0.0
    %85 = vmatprep.subr.mxu0 0.0
    %86 = vmatpush1.msra.mxu0 0.0
    %87 = vmatprep.subr.mxu0 0.0
    %88 = vmatpush1.msra.mxu0 0.0
    %89 = vmatprep.subr.mxu0 0.0
    %90 = vmatpush1.msra.mxu0 0.0
    %91 = vmatprep.subr.mxu0 0.0
    %92 = vmatpush1.msra.mxu0 0.0
    %93 = vmatprep.subr.mxu0 0.0
    %94 = vmatpush1.msra.mxu0 0.0
    %95 = vmatprep.subr.mxu0 0.0
    %96 = vmatpush1.msra.mxu0 0.0
    %97 = vmatprep.subr.mxu0 0.0
    %98 = vmatpush1.msra.mxu0 0.0
    %99 = vmatprep.subr.mxu0 0.0
    %100 = vmatpush1.msra.mxu0 0.0
    %101 = vmatprep.subr.mxu0 0.0
    %102 = vmatpush1.msra.mxu0 0.0
    %103 = vmatprep.subr.mxu0 0.0
    %104 = vmatpush1.msra.mxu0 0.0
    %105 = vmatprep.subr.mxu0 0.0
    %106 = vmatpush1.msra.mxu0 0.0
    %107 = vmatprep.subr.mxu0 0.0
    %108 = vmatpush1.msra.mxu0 0.0
    %109 = vmatprep.subr.mxu0 0.0
    %110 = vmatpush1.msra.mxu0 0.0
    %111 = vmatprep.subr.mxu0 0.0
    %112 = vmatpush1.msra.mxu0 0.0
    %113 = vmatprep.subr.mxu0 0.0
    %114 = vmatpush1.msra.mxu0 0.0
    %115 = vmatprep.subr.mxu0 0.0
    %116 = vmatpush1.msra.mxu0 0.0
    %117 = vmatprep.subr.mxu0 0.0
    %118 = vmatpush1.msra.mxu0 0.0
    %119 = vmatprep.subr.mxu0 0.0
    %120 = vmatpush1.msra.mxu0 0.0
    %121 = vmatprep.subr.mxu0 0.0
    %122 = vmatpush1.msra.mxu0 0.0
    %123 = vmatprep.subr.mxu0 0.0
    %124 = vmatpush1.msra.mxu0 0.0
    %125 = vmatprep.subr.mxu0 0.0
    %126 = vmatpush1.msra.mxu0 0.0
    %127 = vmatprep.subr.mxu0 0.0
    %128 = vmatpush1.msra.mxu0 0.0
    %129 = vmatprep.subr.mxu0 0.0
    %130 = vmatpush1.msra.mxu0 0.0
    %131 = vmatprep.subr.mxu0 0.0
    %132 = vmatpush1.msra.mxu0 0.0
    %133 = vmatprep.subr.mxu0 0.0
    %134 = vmatpush1.msra.mxu0 0.0
    %135 = vmatprep.mubr.f32.mxu0 0.0
    %136 = vmatmul.mubr.f32.gmra.mrb[0].mxu0 %v60
    %v137 = vpop.f32.mrb[0].mxu0
    %v138 = vadd.f32 %v56, %v137
    %v139 = vpop.f32.mrb[0].mxu0
    %140 = vmatprep.mubr.f32.mxu0 0.0
    %141 = vmatmul.mubr.f32.gmra.mrb[0].mxu0 %v63
    %v142 = vpop.f32.mrb[0].mxu0
    %v143 = vadd.f32 %v56, %v142
    %v144 = vpop.f32.mrb[0].mxu0
    %145 = vmatprep.mubr.f32.mxu0 0.0
    %146 = vmatmul.mubr.f32.gmra.mrb[0].mxu0 %v66
    %v147 = vpop.f32.mrb[0].mxu0
    %v148 = vadd.f32 %v56, %v147
    %v149 = vpop.f32.mrb[0].mxu0
    %150 = vmatprep.mubr.f32.mxu0 0.0
    %151 = vmatmul.mubr.f32.gmra.mrb[0].mxu0 %v69
    %v152 = vpop.f32.mrb[0].mxu0
    %v153 = vadd.f32 %v56, %v152
    %v154 = vpop.f32.mrb[0].mxu0
    %155 = vdwg.mxu0
    %156 = vst [vmem:[#allocation7] sm:$0xff] %v138
    %157 = vst [vmem:[#allocation7 + $0x8] sm:$0xff] %v143
    %158 = vst [vmem:[#allocation7 + $0x10] sm:$0xff] %v148
    %159 = vst [vmem:[#allocation7 + $0x18] sm:$0xff] %v153
    // Predicated region
    $region22: #{tpu_custom_call.1} parent=1 // pred_check
      _
    $region23: #{tpu_custom_call.1} parent=1 // pred_check_branch
      %161 = sbr.rel (0) target = $region25
    $region24: #{tpu_custom_call.1} parent=1 // pred_region
      %s163 = ssub.s32 512, 512
      %164 = vsyncadd [#allocation4], %s163
      %s165 = sshll.u32 [#allocation7], 4
      %s166 = int_to_ptr.vmem [resolvable:$true] %s165
      %171 = dma.vmem_to_hbm [thread:$0]  %s166, 512, %s3, [#allocation4], 128, 128, 8
    $region25: #{tpu_custom_call.1} parent=1 // pred_fallthru
      _
    // Predicated region
    $region26: #{tpu_custom_call.1} parent=1 // pred_check
      _
    $region27: #{tpu_custom_call.1} parent=1 // pred_check_branch
      %173 = sbr.rel (0) target = $region29
    $region28: #{tpu_custom_call.1} parent=1 // pred_region
      %174 = dma.done [#allocation4], 512
    $region29: #{tpu_custom_call.1} parent=1 // pred_fallthru
      _
    %175 = vsyncpa [#allocation3], 1
    %176 = vsyncpa [#allocation6], 1
    %177 = vsyncpa [#allocation4], 1

</llo_original>
